<compile_context>
chip_gen: v7x
topology: tpu7x:2x2x1
jax: 0.10.0
libtpu: 0.0.40
codegen_flags: <defaults>
</compile_context>

<pallas_src>
import functools
from typing import NamedTuple

import jax
import jax.numpy as jnp
from jax import lax
from jax.experimental import pallas as pl
from jax.experimental.pallas import tpu as pltpu


def _ru(x: int, m: int) -> int:
    return (x + m - 1) // m * m


def _pick_tile(b: int) -> int:
    # Per-tile FLOPs are tiny while per-grid-step overhead is ~0.35 us, so use
    # the largest tile the batch supports; the batch is padded up to a multiple
    # of the tile (VMEM footprint per row is ~1.5 KB, far from any limit).
    for tb in (1024, 512, 256, 128, 64, 32, 16, 8):
        if b >= tb:
            return tb
    return 8


class PackedParams(NamedTuple):
    slab: jax.Array          # (rows, lanes) bfloat16, all weights + biases
    input_dim: int
    decode_dim: int
    position_dim: int
    dpad: int                # decode_dim padded to a 128-lane multiple
    ppad: int                # position_dim padded to a 128-lane multiple
    o_w1: int
    o_w2: int
    o_w3: int
    o_b: int                 # bias rows: b1 at o_b, b2 at o_b+1, b3 at o_b+2

    @property
    def dims(self):
        return (self.input_dim, self.decode_dim, self.position_dim,
                self.dpad, self.ppad, self.o_w1, self.o_w2, self.o_w3, self.o_b)


def pack_params(w1, b1, w2, b2, w3, b3) -> PackedParams:
    """Pack fc1/fc2/fc3 weights+biases into ONE lane-padded bf16 slab (1 DMA)."""
    w1 = jnp.asarray(w1, jnp.float32)
    w2 = jnp.asarray(w2, jnp.float32)
    w3 = jnp.asarray(w3, jnp.float32)
    din, dd = w1.shape
    p = w3.shape[1]
    dpad = _ru(dd, 128)
    ppad = _ru(p, 128)
    lanes = max(dpad, ppad)

    o_w1 = 0
    o_w2 = _ru(o_w1 + din, 8)
    o_w3 = o_w2 + dpad            # dpad is a multiple of 128, hence of 8
    o_b = o_w3 + dpad
    rows = _ru(o_b + 3, 8)

    slab = jnp.zeros((rows, lanes), jnp.float32)
    slab = slab.at[o_w1:o_w1 + din, :dd].set(w1)
    slab = slab.at[o_w2:o_w2 + dd, :dd].set(w2)
    slab = slab.at[o_w3:o_w3 + dd, :p].set(w3)
    slab = slab.at[o_b, :dd].set(jnp.asarray(b1, jnp.float32).reshape(-1))
    slab = slab.at[o_b + 1, :dd].set(jnp.asarray(b2, jnp.float32).reshape(-1))
    slab = slab.at[o_b + 2, :p].set(jnp.asarray(b3, jnp.float32).reshape(-1))
    slab = slab.astype(jnp.bfloat16)          # bf16 on the wire: half the DMA
    return PackedParams(slab, din, dd, p, dpad, ppad, o_w1, o_w2, o_w3, o_b)


def _head_kernel(dims, sample, *refs):
    din, _dd, _p, dpad, ppad, o_w1, o_w2, o_w3, o_b = dims
    if sample:
        emb_ref, mask_ref, gumbel_ref, slab_ref, logits_ref, pos_ref = refs
    else:
        emb_ref, mask_ref, slab_ref, logits_ref = refs

    bf16, f32 = jnp.bfloat16, jnp.float32

    x = emb_ref[...]
    if x.dtype != bf16:
        x = x.astype(bf16)                                   # (TB, din)

    # All slab views are full-lane-width bf16: no casts, no masked lane loads.
    w1 = slab_ref[o_w1:o_w1 + din, 0:dpad]
    w2 = slab_ref[o_w2:o_w2 + dpad, 0:dpad]
    w3 = slab_ref[o_w3:o_w3 + dpad, 0:ppad]
    b1 = slab_ref[o_b:o_b + 1, 0:dpad]
    b2 = slab_ref[o_b + 1:o_b + 2, 0:dpad]
    b3 = slab_ref[o_b + 2:o_b + 3, 0:ppad]

    # fc1 / fc2: Linear + ReLU ; fc3: Linear.  bf16 MXU inputs, f32 accumulate.
    h = jnp.dot(x, w1, preferred_element_type=f32) + b1.astype(f32)
    h = jnp.maximum(h, 0.0)
    h = jnp.dot(h.astype(bf16), w2, preferred_element_type=f32) + b2.astype(f32)
    h = jnp.maximum(h, 0.0)
    logits = jnp.dot(h.astype(bf16), w3, preferred_element_type=f32) + b3.astype(f32)

    # masked_fill(~mask, -1e9); mask is bf16 (1.0 keep, 0.0 fill).
    logits = jnp.where(mask_ref[...] > 0.5, logits, jnp.float32(-1.0e9))
    logits_ref[...] = logits

    if sample:
        # torch.multinomial(softmax(logits), 1) via Gumbel-max; the Gumbel
        # noise is generated outside the kernel (interpret-mode safe).
        z = logits + gumbel_ref[...]
        win = jnp.max(z, axis=-1, keepdims=True)
        lane = lax.broadcasted_iota(jnp.int32, z.shape, 1)
        pos_ref[...] = jnp.min(jnp.where(z >= win, lane, jnp.int32(ppad)),
                               axis=-1, keepdims=True)


def target_position_head_forward(embedding, additional_feature, mask,
                                 packed: PackedParams,
                                 targetposition=None, *, rng_key=None):
    """Mirror of TargetPositionHead.forward (additional_feature unused)."""
    del additional_feature

    emb = jnp.asarray(embedding)
    if emb.dtype not in (jnp.bfloat16, jnp.float32):
        emb = emb.astype(jnp.float32)
    b, din = emb.shape
    assert din == packed.input_dim
    p, ppad = packed.position_dim, packed.ppad

    mask_f = jnp.asarray(mask)
    if mask_f.dtype != jnp.bfloat16:
        mask_f = mask_f.astype(jnp.bfloat16)      # 2 B/elem mask stream

    tb = _pick_tile(b)
    bp = _ru(b, tb)
    nb = bp // tb
    # TODO(synk): on v7x with large B, pick tb so nb is even so both
    # TensorCores of the chip get work along the "parallel" grid axis.

    if bp != b:
        emb = jnp.pad(emb, ((0, bp - b), (0, 0)))
    if bp != b or ppad != p:
        mpad = jnp.zeros((bp, ppad), jnp.bfloat16)
        mask_f = mpad.at[:b, :p].set(mask_f)

    sample = targetposition is None
    kernel = functools.partial(_head_kernel, packed.dims, sample)
    cparams = pltpu.CompilerParams(dimension_semantics=("parallel",))

    emb_spec = pl.BlockSpec((tb, din), lambda i: (i, 0))
    mask_spec = pl.BlockSpec((tb, ppad), lambda i: (i, 0))
    slab_spec = pl.BlockSpec(packed.slab.shape, lambda i: (0, 0))
    logits_spec = pl.BlockSpec((tb, ppad), lambda i: (i, 0))

    if sample:
        if rng_key is None:
            raise ValueError("rng_key is required when sampling targetposition")
        gumbel = jax.random.gumbel(rng_key, (bp, ppad), jnp.float32)

        logits_full, pos = pl.pallas_call(
            kernel,
            grid=(nb,),
            in_specs=[emb_spec, mask_spec,
                      pl.BlockSpec((tb, ppad), lambda i: (i, 0)),  # gumbel
                      slab_spec],
            out_specs=(logits_spec, pl.BlockSpec((tb, 1), lambda i: (i, 0))),
            out_shape=(jax.ShapeDtypeStruct((bp, ppad), jnp.float32),
                       jax.ShapeDtypeStruct((bp, 1), jnp.int32)),
            compiler_params=cparams,
        )(emb, mask_f, gumbel, packed.slab)
        targetposition = pos[:b, 0]
    else:
        logits_full = pl.pallas_call(
            kernel,
            grid=(nb,),
            in_specs=[emb_spec, mask_spec, slab_spec],
            out_specs=logits_spec,
            out_shape=jax.ShapeDtypeStruct((bp, ppad), jnp.float32),
            compiler_params=cparams,
        )(emb, mask_f, packed.slab)
        tp = jnp.asarray(targetposition)
        if tp.ndim > 1 and tp.shape[-1] == 1:
            tp = jnp.squeeze(tp, axis=-1)         # keeps (B,) even for B == 1
        targetposition = tp

    logits = logits_full[:b, :p] if (bp != b or ppad != p) else logits_full
    return logits, targetposition


def make_params(input_dim, decode_dim, position_dim, key):
    """Deterministic synthetic parameters (shapes from the module __init__)."""
    k1, k2, k3, k4, k5, k6 = jax.random.split(key, 6)
    s1 = 1.0 / jnp.sqrt(input_dim)
    s2 = 1.0 / jnp.sqrt(decode_dim)
    return {
        "w1": jax.random.uniform(k1, (input_dim, decode_dim), jnp.float32, -s1, s1),
        "b1": jax.random.uniform(k4, (1, decode_dim), jnp.float32, -s1, s1),
        "w2": jax.random.uniform(k2, (decode_dim, decode_dim), jnp.float32, -s2, s2),
        "b2": jax.random.uniform(k5, (1, decode_dim), jnp.float32, -s2, s2),
        "w3": jax.random.uniform(k3, (decode_dim, position_dim), jnp.float32, -s2, s2),
        "b3": jax.random.uniform(k6, (1, position_dim), jnp.float32, -s2, s2),
    }


def _reference_forward(embedding, mask, raw):
    h = jnp.maximum(embedding @ raw["w1"] + raw["b1"], 0.0)
    h = jnp.maximum(h @ raw["w2"] + raw["b2"], 0.0)
    logits = h @ raw["w3"] + raw["b3"]
    return jnp.where(mask, logits, jnp.float32(-1.0e9))


if __name__ == "__main__":
    # input_dim=32, decode_dim=32, position_dim=128; batch=8 fills the sublanes.
    B, INPUT_DIM, DECODE_DIM, POSITION_DIM = 8, 32, 32, 128

    key = jax.random.PRNGKey(0)
    k_emb, k_add, k_mask, k_par, k_sample = jax.random.split(key, 5)

    embedding = jax.random.normal(k_emb, (B, INPUT_DIM), jnp.float32)
    additional_feature = jax.random.normal(k_add, (B, 16), jnp.float32)  # unused
    mask = jax.random.bernoulli(k_mask, 0.8, (B, POSITION_DIM))          # bool

    raw = make_params(INPUT_DIM, DECODE_DIM, POSITION_DIM, k_par)
    packed = pack_params(raw["w1"], raw["b1"], raw["w2"], raw["b2"],
                         raw["w3"], raw["b3"])

    # 1) sampling path (fused masked-Gumbel argmax inside the kernel)
    logits, tp = target_position_head_forward(
        embedding, additional_feature, mask, packed, rng_key=k_sample)
    jax.block_until_ready((logits, tp))

    # 2) teacher-forcing path (targetposition provided -> no sampling work)
    given = jnp.zeros((B, 1), jnp.int32)
    logits2, tp2 = target_position_head_forward(
        embedding, additional_feature, mask, packed, targetposition=given)
    jax.block_until_ready((logits2, tp2))

    assert logits.shape == (B, POSITION_DIM) and logits.dtype == jnp.float32
    assert tp.shape == (B,) and tp2.shape == (B,)

    # NOTE: kernel uses bf16 weights/activations on the MXU (f32 accumulate),
    # so logits differ from the f32 reference by up to ~1e-2 relative.
    ref = _reference_forward(embedding, mask, raw)
    assert jnp.allclose(ref, logits, atol=5e-2, rtol=5e-2), "logits mismatch"
    assert jnp.allclose(ref, logits2, atol=5e-2, rtol=5e-2), "logits mismatch"
    assert bool(jnp.all((tp >= 0) & (tp < POSITION_DIM)))
    # sampled positions must land on unmasked slots
    assert bool(jnp.all(mask[jnp.arange(B), tp]))

    print("KERNEL_OK")
</pallas_src>

<mosaic_0001>
module attributes {stable_mosaic.version = 11 : i64} {
  func.func @_head_kernel(%arg0: i32, %arg1: memref<8x32xf32, #tpu.memory_space<vmem>>, %arg2: memref<8x128xbf16, #tpu.memory_space<vmem>>, %arg3: memref<8x128xf32, #tpu.memory_space<vmem>>, %arg4: memref<296x128xbf16, #tpu.memory_space<vmem>>, %arg5: memref<8x128xf32, #tpu.memory_space<vmem>>, %arg6: memref<8x1xi32, #tpu.memory_space<vmem>>) attributes {dimension_semantics = [#tpu.dimension_semantics<parallel>], iteration_bounds = array<i64: 1>, scalar_prefetch = 0 : i64, scratch_operands = 0 : i64, tpu.core_type = #tpu.core_type<tc>, window_params = [{transform_indices = @transform_0, window_bounds = array<i64: 8, 32>}, {transform_indices = @transform_1, window_bounds = array<i64: 8, 128>}, {transform_indices = @transform_2, window_bounds = array<i64: 8, 128>}, {pipeline_mode = #tpu.pipeline_mode<synchronous>, transform_indices = @transform_3, window_bounds = array<i64: 296, 128>}, {transform_indices = @transform_4, window_bounds = array<i64: 8, 128>}, {transform_indices = @transform_5, window_bounds = array<i64: 8, 1>}]} {
    %c0 = arith.constant 0 : index
    %c0_0 = arith.constant 0 : index
    %0 = vector.load %arg1[%c0, %c0_0] : memref<8x32xf32, #tpu.memory_space<vmem>>, vector<8x32xf32>
    %1 = arith.truncf %0 : vector<8x32xf32> to vector<8x32xbf16>
    %c0_1 = arith.constant 0 : index
    %c0_2 = arith.constant 0 : index
    %2 = vector.load %arg4[%c0_1, %c0_2] : memref<296x128xbf16, #tpu.memory_space<vmem>>, vector<32x128xbf16>
    %c32 = arith.constant 32 : index
    %c0_3 = arith.constant 0 : index
    %3 = vector.load %arg4[%c32, %c0_3] : memref<296x128xbf16, #tpu.memory_space<vmem>>, vector<128x128xbf16>
    %c160 = arith.constant 160 : index
    %c0_4 = arith.constant 0 : index
    %4 = vector.load %arg4[%c160, %c0_4] : memref<296x128xbf16, #tpu.memory_space<vmem>>, vector<128x128xbf16>
    %c288 = arith.constant 288 : index
    %c0_5 = arith.constant 0 : index
    %5 = vector.load %arg4[%c288, %c0_5] : memref<296x128xbf16, #tpu.memory_space<vmem>>, vector<1x128xbf16>
    %c289 = arith.constant 289 : index
    %c0_6 = arith.constant 0 : index
    %6 = vector.load %arg4[%c289, %c0_6] : memref<296x128xbf16, #tpu.memory_space<vmem>>, vector<1x128xbf16>
    %c290 = arith.constant 290 : index
    %c0_7 = arith.constant 0 : index
    %7 = vector.load %arg4[%c290, %c0_7] : memref<296x128xbf16, #tpu.memory_space<vmem>>, vector<1x128xbf16>
    %cst = arith.constant dense<0.000000e+00> : vector<8x128xf32>
    %8 = tpu.matmul %1, %2, %cst {dimension_numbers = #tpu.dot_dimension_numbers<[1], [0], [0], [1], [0, 0, 1, 1], [], []>} : vector<8x32xbf16>, vector<32x128xbf16>, vector<8x128xf32> -> vector<8x128xf32>
    %9 = arith.extf %5 : vector<1x128xbf16> to vector<1x128xf32>
    %10 = vector.broadcast %9 : vector<1x128xf32> to vector<8x128xf32>
    %11 = arith.addf %8, %10 : vector<8x128xf32>
    %cst_8 = arith.constant 0.000000e+00 : f32
    %12 = vector.broadcast %cst_8 : f32 to vector<8x128xf32>
    %13 = arith.maximumf %11, %12 : vector<8x128xf32>
    %14 = arith.truncf %13 : vector<8x128xf32> to vector<8x128xbf16>
    %cst_9 = arith.constant dense<0.000000e+00> : vector<8x128xf32>
    %15 = tpu.matmul %14, %3, %cst_9 {dimension_numbers = #tpu.dot_dimension_numbers<[1], [0], [0], [1], [0, 0, 1, 1], [], []>} : vector<8x128xbf16>, vector<128x128xbf16>, vector<8x128xf32> -> vector<8x128xf32>
    %16 = arith.extf %6 : vector<1x128xbf16> to vector<1x128xf32>
    %17 = vector.broadcast %16 : vector<1x128xf32> to vector<8x128xf32>
    %18 = arith.addf %15, %17 : vector<8x128xf32>
    %cst_10 = arith.constant 0.000000e+00 : f32
    %19 = vector.broadcast %cst_10 : f32 to vector<8x128xf32>
    %20 = arith.maximumf %18, %19 : vector<8x128xf32>
    %21 = arith.truncf %20 : vector<8x128xf32> to vector<8x128xbf16>
    %cst_11 = arith.constant dense<0.000000e+00> : vector<8x128xf32>
    %22 = tpu.matmul %21, %4, %cst_11 {dimension_numbers = #tpu.dot_dimension_numbers<[1], [0], [0], [1], [0, 0, 1, 1], [], []>} : vector<8x128xbf16>, vector<128x128xbf16>, vector<8x128xf32> -> vector<8x128xf32>
    %23 = arith.extf %7 : vector<1x128xbf16> to vector<1x128xf32>
    %24 = vector.broadcast %23 : vector<1x128xf32> to vector<8x128xf32>
    %25 = arith.addf %22, %24 : vector<8x128xf32>
    %c0_12 = arith.constant 0 : index
    %c0_13 = arith.constant 0 : index
    %26 = vector.load %arg2[%c0_12, %c0_13] : memref<8x128xbf16, #tpu.memory_space<vmem>>, vector<8x128xbf16>
    %cst_14 = arith.constant 5.000000e-01 : bf16
    %27 = vector.broadcast %cst_14 : bf16 to vector<8x128xbf16>
    %28 = arith.cmpf ogt, %26, %27 : vector<8x128xbf16>
    %cst_15 = arith.constant -1.000000e+09 : f32
    %29 = vector.broadcast %cst_15 : f32 to vector<8x128xf32>
    %30 = arith.select %28, %25, %29 : vector<8x128xi1>, vector<8x128xf32>
    %c0_16 = arith.constant 0 : index
    %c0_17 = arith.constant 0 : index
    %31 = vector.load %arg5[%c0_16, %c0_17] : memref<8x128xf32, #tpu.memory_space<vmem>>, vector<8x128xf32>
    tpu.vector_store %arg5[%c0_16, %c0_17], %30 {strides = array<i32>} : memref<8x128xf32, #tpu.memory_space<vmem>>, vector<8x128xf32>,
    %c0_18 = arith.constant 0 : index
    %c0_19 = arith.constant 0 : index
    %32 = vector.load %arg3[%c0_18, %c0_19] : memref<8x128xf32, #tpu.memory_space<vmem>>, vector<8x128xf32>
    %33 = arith.addf %30, %32 : vector<8x128xf32>
    %cst_20 = arith.constant dense<0xFF800000> : vector<8xf32>
    %34 = vector.multi_reduction <maximumf>, %33, %cst_20 [1] : vector<8x128xf32> to vector<8xf32>
    %35 = vector.shape_cast %34 : vector<8xf32> to vector<8x1xf32>
    %36 = tpu.iota {dimensions = array<i32: 1>} : vector<8x128xi32>
    %37 = vector.broadcast %35 : vector<8x1xf32> to vector<8x128xf32>
    %38 = arith.cmpf oge, %33, %37 : vector<8x128xf32>
    %c128_i32 = arith.constant 128 : i32
    %39 = vector.broadcast %c128_i32 : i32 to vector<8x128xi32>
    %40 = arith.select %38, %36, %39 : vector<8x128xi1>, vector<8x128xi32>
    %cst_21 = arith.constant dense<2147483647> : vector<8xi32>
    %41 = vector.multi_reduction <minsi>, %40, %cst_21 [1] : vector<8x128xi32> to vector<8xi32>
    %42 = vector.shape_cast %41 : vector<8xi32> to vector<8x1xi32>
    %c0_22 = arith.constant 0 : index
    %c0_23 = arith.constant 0 : index
    %43 = vector.load %arg6[%c0_22, %c0_23] : memref<8x1xi32, #tpu.memory_space<vmem>>, vector<8x1xi32>
    tpu.vector_store %arg6[%c0_22, %c0_23], %42 {strides = array<i32>} : memref<8x1xi32, #tpu.memory_space<vmem>>, vector<8x1xi32>,
    return
  }
  func.func @transform_0(%arg0: i32) -> (i32, i32) {
    %c0_i32 = arith.constant 0 : i32
    %c0_i32_0 = arith.constant 0 : i32
    return %arg0, %c0_i32 : i32, i32
  }
  func.func @transform_1(%arg0: i32) -> (i32, i32) {
    %c0_i32 = arith.constant 0 : i32
    %c0_i32_0 = arith.constant 0 : i32
    return %arg0, %c0_i32 : i32, i32
  }
  func.func @transform_2(%arg0: i32) -> (i32, i32) {
    %c0_i32 = arith.constant 0 : i32
    %c0_i32_0 = arith.constant 0 : i32
    return %arg0, %c0_i32 : i32, i32
  }
  func.func @transform_3(%arg0: i32) -> (i32, i32) {
    %c0_i32 = arith.constant 0 : i32
    %c0_i32_0 = arith.constant 0 : i32
    %c0_i32_1 = arith.constant 0 : i32
    return %c0_i32, %c0_i32_0 : i32, i32
  }
  func.func @transform_4(%arg0: i32) -> (i32, i32) {
    %c0_i32 = arith.constant 0 : i32
    %c0_i32_0 = arith.constant 0 : i32
    return %arg0, %c0_i32 : i32, i32
  }
  func.func @transform_5(%arg0: i32) -> (i32, i32) {
    %c0_i32 = arith.constant 0 : i32
    %c0_i32_0 = arith.constant 0 : i32
    return %arg0, %c0_i32 : i32, i32
  }
}

</mosaic_0001>

<llo_original>
// kernel: tpu_custom_call.1
$region0: #{tpu_custom_call.1}
  #allocation0 [shape = 'u32[]', space=smem, size = 0x4, offset = 0x4, fixed_abs, tag = 'smem constant byte address 0x4 - core index']
  #allocation1 [shape = 'u32[144,128]{1,0:T(1,128)}', space=vmem, size = 0x12000, scoped, tag = 'internal scratch']
  %s0 = inlined_call_operand.hbm [shape: f32[8,32], index: 0, kind: input, shape index: {}]
  %s1 = inlined_call_operand.hbm [shape: bf16[8,128], index: 1, kind: input, shape index: {}]
  %s2 = inlined_call_operand.hbm [shape: f32[8,128], index: 2, kind: input, shape index: {}]
  %s3 = inlined_call_operand.hbm [shape: bf16[296,128], index: 3, kind: input, shape index: {}]
  %s4 = inlined_call_operand.hbm [shape: f32[8,128], index: 4, kind: output, shape index: {0}]
  %s5 = inlined_call_operand.vmem [shape: s32[8,1], index: 5, kind: output, shape index: {1}]
  %6 = xla_tuple %s4, %s5
  %s7 = sld [smem:[#allocation0]]
  $region50: #{tpu_custom_call.1} parent=0
    _
  %s9 = ssub.s32 1, %s7
  %s10 = scalar_select 0, %s9, %s7
  $region1: #{tpu_custom_call.1} parent=0
    #allocation2 [shape = 'u8[4096]{0}', space=vmem, size = 0x1000, scoped, tag = 'input window, operand 0, single buffered']
    #allocation3 [shape = 's32[1]{0}', space=sflag, size = 0x4, scoped, tag = 'scoped memory for tpu_custom_call.1']
    #allocation4 [shape = 's32[1]{0}', space=sflag, size = 0x4, scoped, tag = 'scoped memory for tpu_custom_call.1']
    #allocation5 [shape = 'u8[2048]{0}', space=vmem, size = 0x800, scoped, tag = 'input window, operand 1, single buffered']
    #allocation6 [shape = 's32[1]{0}', space=sflag, size = 0x4, scoped, tag = 'scoped memory for tpu_custom_call.1']
    #allocation7 [shape = 'u8[4096]{0}', space=vmem, size = 0x1000, scoped, tag = 'input window, operand 2, single buffered']
    #allocation8 [shape = 'u8[75776]{0}', space=vmem, size = 0x12800, scoped, tag = 'input window, operand 3, single buffered']
    #allocation9 [shape = 's32[1]{0}', space=sflag, size = 0x4, scoped, tag = 'scoped memory for tpu_custom_call.1']
    #allocation10 [shape = 'u8[4096]{0}', space=vmem, size = 0x1000, scoped, tag = 'output window, operand 0, single buffered']
    %11 = vsyncpa [#allocation3], 0
    %12 = vsyncpa [#allocation6], 0
    %13 = vsyncpa [#allocation9], 0
    %14 = vsyncpa [#allocation4], 0
    // Predicated region
    $region2: #{tpu_custom_call.1} parent=1 // pred_check
      _
    $region3: #{tpu_custom_call.1} parent=1 // pred_check_branch
      %16 = sbr.rel (0) target = $region5
    $region4: #{tpu_custom_call.1} parent=1 // pred_region
      %s18 = ssub.s32 128, 128
      %19 = vsyncadd [#allocation3], %s18
      %s21 = sshll.u32 [#allocation2], 4
      %s22 = int_to_ptr.vmem [resolvable:$true] %s21
      %24 = dma.hbm_to_vmem [thread:$0]  %s0, 128, %s22, [#allocation3]
    $region5: #{tpu_custom_call.1} parent=1 // pred_fallthru
      _
    // Predicated region
    $region6: #{tpu_custom_call.1} parent=1 // pred_check
      _
    $region7: #{tpu_custom_call.1} parent=1 // pred_check_branch
      %26 = sbr.rel (0) target = $region9
    $region8: #{tpu_custom_call.1} parent=1 // pred_region
      %s28 = ssub.s32 64, 64
      %29 = vsyncadd [#allocation6], %s28
      %s31 = sshll.u32 [#allocation5], 4
      %s32 = int_to_ptr.vmem [resolvable:$true] %s31
      %34 = dma.hbm_to_vmem [thread:$0]  %s1, 64, %s32, [#allocation6]
    $region9: #{tpu_custom_call.1} parent=1 // pred_fallthru
      _
    // Predicated region
    $region10: #{tpu_custom_call.1} parent=1 // pred_check
      _
    $region11: #{tpu_custom_call.1} parent=1 // pred_check_branch
      %36 = sbr.rel (0) target = $region13
    $region12: #{tpu_custom_call.1} parent=1 // pred_region
      %s38 = ssub.s32 128, 128
      %39 = vsyncadd [#allocation6], %s38
      %s41 = sshll.u32 [#allocation7], 4
      %s42 = int_to_ptr.vmem [resolvable:$true] %s41
      %44 = dma.hbm_to_vmem [thread:$0]  %s2, 128, %s42, [#allocation6]
    $region13: #{tpu_custom_call.1} parent=1 // pred_fallthru
      _
    // Predicated region
    $region14: #{tpu_custom_call.1} parent=1 // pred_check
      _
    $region15: #{tpu_custom_call.1} parent=1 // pred_check_branch
      %46 = sbr.rel (0) target = $region17
    $region16: #{tpu_custom_call.1} parent=1 // pred_region
      %s48 = ssub.s32 2368, 2368
      %49 = vsyncadd [#allocation9], %s48
      %s50 = sshll.u32 [#allocation8], 4
      %s51 = int_to_ptr.vmem [resolvable:$true] %s50
      %56 = dma.hbm_to_vmem [thread:$0]  %s3, 2368, %s51, [#allocation9], 64, 64, 4
    $region17: #{tpu_custom_call.1} parent=1 // pred_fallthru
      _
    // Predicated region
    $region18: #{tpu_custom_call.1} parent=1 // pred_check
      _
    $region19: #{tpu_custom_call.1} parent=1 // pred_check_branch
      %58 = sbr.rel (0) target = $region21
    $region20: #{tpu_custom_call.1} parent=1 // pred_region
      %59 = dma.done [#allocation3], 128
    $region21: #{tpu_custom_call.1} parent=1 // pred_fallthru
      _
    // Predicated region
    $region22: #{tpu_custom_call.1} parent=1 // pred_check
      _
    $region23: #{tpu_custom_call.1} parent=1 // pred_check_branch
      %61 = sbr.rel (0) target = $region25
    $region24: #{tpu_custom_call.1} parent=1 // pred_region
      %62 = dma.done [#allocation6], 64
    $region25: #{tpu_custom_call.1} parent=1 // pred_fallthru
      _
    // Predicated region
    $region26: #{tpu_custom_call.1} parent=1 // pred_check
      _
    $region27: #{tpu_custom_call.1} parent=1 // pred_check_branch
      %64 = sbr.rel (0) target = $region29
    $region28: #{tpu_custom_call.1} parent=1 // pred_region
      %65 = dma.done [#allocation6], 128
    $region29: #{tpu_custom_call.1} parent=1 // pred_fallthru
      _
    // Predicated region
    $region30: #{tpu_custom_call.1} parent=1 // pred_check
      _
    $region31: #{tpu_custom_call.1} parent=1 // pred_check_branch
      %67 = sbr.rel (0) target = $region33
    $region32: #{tpu_custom_call.1} parent=1 // pred_region
      %68 = dma.done [#allocation9], 2368
    $region33: #{tpu_custom_call.1} parent=1 // pred_fallthru
      _
    %v73 = vld [vmem:[#allocation2] sm:$0xff]
    %v74 = vpack.c.bf16 %v73, %v73
    %v75 = vld [vmem:[#allocation8] sm:$0xf]
    %v76 = vld [vmem:[#allocation8 + $0x4] sm:$0xf]
    %v77 = vld [vmem:[#allocation8 + $0x8] sm:$0xf]
    %v78 = vld [vmem:[#allocation8 + $0xc] sm:$0xf]
    %v79 = vld [vmem:[#allocation8 + $0x10] sm:$0xf]
    %v80 = vld [vmem:[#allocation8 + $0x14] sm:$0xf]
    %v81 = vld [vmem:[#allocation8 + $0x18] sm:$0xf]
    %v82 = vld [vmem:[#allocation8 + $0x1c] sm:$0xf]
    %v83 = vld [vmem:[#allocation8 + $0x20] sm:$0xf]
    %v84 = vld [vmem:[#allocation8 + $0x24] sm:$0xf]
    %v85 = vld [vmem:[#allocation8 + $0x28] sm:$0xf]
    %v86 = vld [vmem:[#allocation8 + $0x2c] sm:$0xf]
    %v87 = vld [vmem:[#allocation8 + $0x30] sm:$0xf]
    %v88 = vld [vmem:[#allocation8 + $0x34] sm:$0xf]
    %v89 = vld [vmem:[#allocation8 + $0x38] sm:$0xf]
    %v90 = vld [vmem:[#allocation8 + $0x3c] sm:$0xf]
    %v91 = vld [vmem:[#allocation8 + $0x40] sm:$0xf]
    %v92 = vld [vmem:[#allocation8 + $0x44] sm:$0xf]
    %v93 = vld [vmem:[#allocation8 + $0x48] sm:$0xf]
    %v94 = vld [vmem:[#allocation8 + $0x4c] sm:$0xf]
    %v95 = vld [vmem:[#allocation8 + $0x50] sm:$0xf]
    %v96 = vld [vmem:[#allocation8 + $0x54] sm:$0xf]
    %v97 = vld [vmem:[#allocation8 + $0x58] sm:$0xf]
    %v98 = vld [vmem:[#allocation8 + $0x5c] sm:$0xf]
    %v99 = vld [vmem:[#allocation8 + $0x60] sm:$0xf]
    %v100 = vld [vmem:[#allocation8 + $0x64] sm:$0xf]
    %v101 = vld [vmem:[#allocation8 + $0x68] sm:$0xf]
    %v102 = vld [vmem:[#allocation8 + $0x6c] sm:$0xf]
    %v103 = vld [vmem:[#allocation8 + $0x70] sm:$0xf]
    %v104 = vld [vmem:[#allocation8 + $0x74] sm:$0xf]
    %v105 = vld [vmem:[#allocation8 + $0x78] sm:$0xf]
    %v106 = vld [vmem:[#allocation8 + $0x7c] sm:$0xf]
    %v107 = vld [vmem:[#allocation8 + $0x80] sm:$0xf]
    %v108 = vld [vmem:[#allocation8 + $0x84] sm:$0xf]
    %v109 = vld [vmem:[#allocation8 + $0x88] sm:$0xf]
    %v110 = vld [vmem:[#allocation8 + $0x8c] sm:$0xf]
    %v111 = vld [vmem:[#allocation8 + $0x90] sm:$0x1]
    %v112 = vld [vmem:[#allocation8 + $0x90] sm:$0x2]
    %v113 = vunpack.c.l.bf16 %v111
    %v114 = vlaneseq
    %v115 = vshrl.u32 %v114, 7
    %v116 = vsub.s32 0, %v115
    %v117 = vrot.slane %v113, %v116
    %v122 = vunpack.c.l.b16 %v75
    %v123 = vunpack.c.l.b16 %v76
    %v124 = vunpack.c.l.b16 %v77
    %v125 = vunpack.c.l.b16 %v78
    %v126 = vpack.c.b16 %v123, %v122
    %v127 = vpack.c.b16 %v125, %v124
    %vm130 = vcmask 261120
    %v132 = vsel %vm130, %v74, 0
    %134 = vmatprep.subr.bf16.mxu0 0
    %135 = vmatpush1.bf16.msra.mxu0 %v126
    %136 = vmatprep.subr.bf16.mxu0 0
    %137 = vmatpush1.bf16.msra.mxu0 %v127
    %138 = vmatprep.subr.bf16.mxu0 0
    %139 = vmatpush1.bf16.msra.mxu0 0
    %140 = vmatprep.subr.bf16.mxu0 0
    %141 = vmatpush1.bf16.msra.mxu0 0
    %142 = vmatprep.subr.bf16.mxu0 0
    %143 = vmatpush1.bf16.msra.mxu0 0
    %144 = vmatprep.subr.bf16.mxu0 0
    %145 = vmatpush1.bf16.msra.mxu0 0
    %146 = vmatprep.subr.bf16.mxu0 0
    %147 = vmatpush1.bf16.msra.mxu0 0
    %148 = vmatprep.subr.bf16.mxu0 0
    %149 = vmatpush1.bf16.msra.mxu0 0
    %150 = vmatprep.subr.bf16.mxu0 0
    %151 = vmatpush1.bf16.msra.mxu0 0
    %152 = vmatprep.subr.bf16.mxu0 0
    %153 = vmatpush1.bf16.msra.mxu0 0
    %154 = vmatprep.subr.bf16.mxu0 0
    %155 = vmatpush1.bf16.msra.mxu0 0
    %156 = vmatprep.subr.bf16.mxu0 0
    %157 = vmatpush1.bf16.msra.mxu0 0
    %158 = vmatprep.subr.bf16.mxu0 0
    %159 = vmatpush1.bf16.msra.mxu0 0
    %160 = vmatprep.subr.bf16.mxu0 0
    %161 = vmatpush1.bf16.msra.mxu0 0
    %162 = vmatprep.subr.bf16.mxu0 0
    %163 = vmatpush1.bf16.msra.mxu0 0
    %164 = vmatprep.subr.bf16.mxu0 0
    %165 = vmatpush1.bf16.msra.mxu0 0
    %166 = vmatprep.mubr.bf16.mxu0 0
    %167 = vmatmul.mubr.bf16.gmra.mrb[0].mxu0 %v132
    %v168 = vpop.f32.mrb[0].mxu0
    %v169 = vadd.f32 %v117, %v168
    %v170 = vpop.f32.mrb[0].mxu0
    %v171 = vpop.f32.mrb[0].mxu0
    %v172 = vpop.f32.mrb[0].mxu0
    %173 = vdwg.mxu0
    %v174 = vmax.f32 %v169, 0.0
    %v175 = vpack.c.bf16 %v174, %v174
    %v176 = vlaneseq
    %v177 = vshrl.u32 %v176, 7
    %v178 = vsub.s32 1, %v177
    %v179 = vrot.slane %v113, %v178
    %v196 = vunpack.c.l.b16 %v79
    %v197 = vunpack.c.l.b16 %v80
    %v198 = vunpack.c.l.b16 %v81
    %v199 = vunpack.c.l.b16 %v82
    %v200 = vunpack.c.l.b16 %v83
    %v201 = vunpack.c.l.b16 %v84
    %v202 = vunpack.c.l.b16 %v85
    %v203 = vunpack.c.l.b16 %v86
    %v204 = vunpack.c.l.b16 %v87
    %v205 = vunpack.c.l.b16 %v88
    %v206 = vunpack.c.l.b16 %v89
    %v207 = vunpack.c.l.b16 %v90
    %v208 = vunpack.c.l.b16 %v91
    %v209 = vunpack.c.l.b16 %v92
    %v210 = vunpack.c.l.b16 %v93
    %v211 = vunpack.c.l.b16 %v94
    %v212 = vpack.c.b16 %v197, %v196
    %v213 = vpack.c.b16 %v199, %v198
    %v214 = vpack.c.b16 %v201, %v200
    %v215 = vpack.c.b16 %v203, %v202
    %v216 = vpack.c.b16 %v205, %v204
    %v217 = vpack.c.b16 %v207, %v206
    %v218 = vpack.c.b16 %v209, %v208
    %v219 = vpack.c.b16 %v211, %v210
    %228 = vmatprep.subr.bf16.mxu0 0
    %229 = vmatpush1.bf16.msra.mxu0 %v212
    %230 = vmatprep.subr.bf16.mxu0 0
    %231 = vmatpush1.bf16.msra.mxu0 %v213
    %232 = vmatprep.subr.bf16.mxu0 0
    %233 = vmatpush1.bf16.msra.mxu0 %v214
    %234 = vmatprep.subr.bf16.mxu0 0
    %235 = vmatpush1.bf16.msra.mxu0 %v215
    %236 = vmatprep.subr.bf16.mxu0 0
    %237 = vmatpush1.bf16.msra.mxu0 %v216
    %238 = vmatprep.subr.bf16.mxu0 0
    %239 = vmatpush1.bf16.msra.mxu0 %v217
    %240 = vmatprep.subr.bf16.mxu0 0
    %241 = vmatpush1.bf16.msra.mxu0 %v218
    %242 = vmatprep.subr.bf16.mxu0 0
    %243 = vmatpush1.bf16.msra.mxu0 %v219
    %244 = vmatprep.subr.bf16.mxu0 0
    %245 = vmatpush1.bf16.msra.mxu0 0
    %246 = vmatprep.subr.bf16.mxu0 0
    %247 = vmatpush1.bf16.msra.mxu0 0
    %248 = vmatprep.subr.bf16.mxu0 0
    %249 = vmatpush1.bf16.msra.mxu0 0
    %250 = vmatprep.subr.bf16.mxu0 0
    %251 = vmatpush1.bf16.msra.mxu0 0
    %252 = vmatprep.subr.bf16.mxu0 0
    %253 = vmatpush1.bf16.msra.mxu0 0
    %254 = vmatprep.subr.bf16.mxu0 0
    %255 = vmatpush1.bf16.msra.mxu0 0
    %256 = vmatprep.subr.bf16.mxu0 0
    %257 = vmatpush1.bf16.msra.mxu0 0
    %258 = vmatprep.subr.bf16.mxu0 0
    %259 = vmatpush1.bf16.msra.mxu0 0
    %260 = vmatprep.mubr.bf16.mxu0 0
    %261 = vmatmul.mubr.bf16.gmra.mrb[0].mxu0 %v175
    %v262 = vpop.f32.mrb[0].mxu0
    %v263 = vadd.f32 %v179, %v262
    %v264 = vpop.f32.mrb[0].mxu0
    %v265 = vpop.f32.mrb[0].mxu0
    %v266 = vpop.f32.mrb[0].mxu0
    %267 = vdwg.mxu0
    %v268 = vmax.f32 %v263, 0.0
    %v269 = vpack.c.bf16 %v268, %v268
    %v270 = vunpack.c.l.bf16 %v112
    %v271 = vlaneseq
    %v272 = vshrl.u32 %v271, 7
    %v273 = vsub.s32 2, %v272
    %v274 = vrot.slane %v270, %v273
    %v291 = vunpack.c.l.b16 %v95
    %v292 = vunpack.c.l.b16 %v96
    %v293 = vunpack.c.l.b16 %v97
    %v294 = vunpack.c.l.b16 %v98
    %v295 = vunpack.c.l.b16 %v99
    %v296 = vunpack.c.l.b16 %v100
    %v297 = vunpack.c.l.b16 %v101
    %v298 = vunpack.c.l.b16 %v102
    %v299 = vunpack.c.l.b16 %v103
    %v300 = vunpack.c.l.b16 %v104
    %v301 = vunpack.c.l.b16 %v105
    %v302 = vunpack.c.l.b16 %v106
    %v303 = vunpack.c.l.b16 %v107
    %v304 = vunpack.c.l.b16 %v108
    %v305 = vunpack.c.l.b16 %v109
    %v306 = vunpack.c.l.b16 %v110
    %v307 = vpack.c.b16 %v292, %v291
    %v308 = vpack.c.b16 %v294, %v293
    %v309 = vpack.c.b16 %v296, %v295
    %v310 = vpack.c.b16 %v298, %v297
    %v311 = vpack.c.b16 %v300, %v299
    %v312 = vpack.c.b16 %v302, %v301
    %v313 = vpack.c.b16 %v304, %v303
    %v314 = vpack.c.b16 %v306, %v305
    %323 = vmatprep.subr.bf16.mxu0 0
    %324 = vmatpush1.bf16.msra.mxu0 %v307
    %325 = vmatprep.subr.bf16.mxu0 0
    %326 = vmatpush1.bf16.msra.mxu0 %v308
    %327 = vmatprep.subr.bf16.mxu0 0
    %328 = vmatpush1.bf16.msra.mxu0 %v309
    %329 = vmatprep.subr.bf16.mxu0 0
    %330 = vmatpush1.bf16.msra.mxu0 %v310
    %331 = vmatprep.subr.bf16.mxu0 0
    %332 = vmatpush1.bf16.msra.mxu0 %v311
    %333 = vmatprep.subr.bf16.mxu0 0
    %334 = vmatpush1.bf16.msra.mxu0 %v312
    %335 = vmatprep.subr.bf16.mxu0 0
    %336 = vmatpush1.bf16.msra.mxu0 %v313
    %337 = vmatprep.subr.bf16.mxu0 0
    %338 = vmatpush1.bf16.msra.mxu0 %v314
    %339 = vmatprep.subr.bf16.mxu0 0
    %340 = vmatpush1.bf16.msra.mxu0 0
    %341 = vmatprep.subr.bf16.mxu0 0
    %342 = vmatpush1.bf16.msra.mxu0 0
    %343 = vmatprep.subr.bf16.mxu0 0
    %344 = vmatpush1.bf16.msra.mxu0 0
    %345 = vmatprep.subr.bf16.mxu0 0
    %346 = vmatpush1.bf16.msra.mxu0 0
    %347 = vmatprep.subr.bf16.mxu0 0
    %348 = vmatpush1.bf16.msra.mxu0 0
    %349 = vmatprep.subr.bf16.mxu0 0
    %350 = vmatpush1.bf16.msra.mxu0 0
    %351 = vmatprep.subr.bf16.mxu0 0
    %352 = vmatpush1.bf16.msra.mxu0 0
    %353 = vmatprep.subr.bf16.mxu0 0
    %354 = vmatpush1.bf16.msra.mxu0 0
    %355 = vmatprep.mubr.bf16.mxu0 0
    %356 = vmatmul.mubr.bf16.gmra.mrb[0].mxu0 %v269
    %v357 = vpop.f32.mrb[0].mxu0
    %v358 = vadd.f32 %v274, %v357
    %v359 = vpop.f32.mrb[0].mxu0
    %v360 = vpop.f32.mrb[0].mxu0
    %v361 = vpop.f32.mrb[0].mxu0
    %362 = vdwg.mxu0
    %v363 = vld [vmem:[#allocation5] sm:$0xf]
    %vm364 = vcmp.gt.bf16.partialorder %v363, 1056980736
    %v365 = vsel %vm364, 65537, 0
    %v366 = vunpack.c.l.b16 %v365
    %vm367 = vcmp.ne.s32.totalorder %v366, 0
    %v368 = vsel %vm367, %v358, -1e+09
    %369 = vst [vmem:[#allocation10] sm:$0xff] %v368
    %v370 = vld [vmem:[#allocation7] sm:$0xff]
    %v371 = vadd.f32 %v368, %v370
    %372 = vmax.xlane.f32.xlu0 %v371
    %v373 = vpop.xlane.xlu0 %372
    %v374 = vlaneseq
    %v375 = vand.u32 %v374, 127
    %vm376 = vcmp.ge.f32.partialorder %v371, %v373
    %v377 = vsel %vm376, %v375, 128
    %v378 = vand.u32 %v377, 65535
    %v379 = vshra.s32 %v377, 16
    %v380 = vcvt.s32.f32 %v378
    %v381 = vcvt.s32.f32 %v379
    %382 = vmin.xlane.f32.xlu0 %v381
    %v383 = vpop.xlane.xlu0 %382
    %vm384 = vcmp.eq.f32.partialorder %v381, %v383
    %v385 = vsel %vm384, %v380, inf
    %386 = vmin.xlane.f32.xlu0 %v385
    %v387 = vpop.xlane.xlu0 %386
    %v388 = vcvt.f32.s32 %v387
    %v389 = vcvt.f32.s32 %v383
    %v390 = vshll.u32 %v389, 16
    %v391 = vadd.s32 %v390, %v388
    %vm392 = vcmask 7168
    %393 = vst.msk [vmem:[%s5] sm:$0xff] %vm392, %v391
    // Predicated region
    $region34: #{tpu_custom_call.1} parent=1 // pred_check
      _
    $region35: #{tpu_custom_call.1} parent=1 // pred_check_branch
      %395 = sbr.rel (0) target = $region37
    $region36: #{tpu_custom_call.1} parent=1 // pred_region
      %s397 = ssub.s32 128, 128
      %398 = vsyncadd [#allocation4], %s397
      %s400 = sshll.u32 [#allocation10], 4
      %s401 = int_to_ptr.vmem [resolvable:$true] %s400
      %403 = dma.vmem_to_hbm [thread:$0]  %s401, 128, %s4, [#allocation4]
    $region37: #{tpu_custom_call.1} parent=1 // pred_fallthru
      _
    // Predicated region
    $region38: #{tpu_custom_call.1} parent=1 // pred_check
      _
    $region39: #{tpu_custom_call.1} parent=1 // pred_check_branch
      %405 = sbr.rel (0) target = $region41
    $region40: #{tpu_custom_call.1} parent=1 // pred_region
      _
    $region41: #{tpu_custom_call.1} parent=1 // pred_fallthru
      _
    // Predicated region
    $region42: #{tpu_custom_call.1} parent=1 // pred_check
      _
    $region43: #{tpu_custom_call.1} parent=1 // pred_check_branch
      %407 = sbr.rel (0) target = $region45
    $region44: #{tpu_custom_call.1} parent=1 // pred_region
      %408 = dma.done [#allocation4], 128
    $region45: #{tpu_custom_call.1} parent=1 // pred_fallthru
      _
    // Predicated region
    $region46: #{tpu_custom_call.1} parent=1 // pred_check
      _
    $region47: #{tpu_custom_call.1} parent=1 // pred_check_branch
      %410 = sbr.rel (0) target = $region49
    $region48: #{tpu_custom_call.1} parent=1 // pred_region
      _
    $region49: #{tpu_custom_call.1} parent=1 // pred_fallthru
      _
    %411 = vsyncpa [#allocation3], 1
    %412 = vsyncpa [#allocation6], 1
    %413 = vsyncpa [#allocation9], 1
    %414 = vsyncpa [#allocation4], 1

</llo_original>
